<compile_context>
chip_gen: v5e
topology: v5e:2x2
jax: 0.10.0
libtpu: 0.0.40
codegen_flags: <defaults>
</compile_context>

<pallas_src>
import jax
import jax.numpy as jnp
import numpy as np
from jax.experimental import pallas as pl
from jax.experimental.pallas import tpu as pltpu

# Small, module-consistent shapes.
B, S, H, P = 2, 8, 32, 16
VEC_LANES = 128                      # lane-dense packed param row width
BANDWIDTH = 0.5
INV_SQRT_2PI = 0.3989422804014327


def tsn_kernel(lens_ref,             # (2*B, 1, 1) int32: [cap_lens ; thr_lens]
               tok_ref,              # (2*B*S, H): [caption tokens ; threshold tokens]
               w_ref,                # (H, H+P):  [w_enc | w1]
               vec_ref,              # (1, 128):  [b_enc | b1 | w2_row | b2 | pad]
               out_ref):             # (B, 1)
    # ---- unpack the packed parameter slabs (static slices, zero cost) ----
    w_enc = w_ref[:, :H]                                   # (H, H)
    w1 = w_ref[:, H:H + P]                                 # (H, P)
    b_enc = vec_ref[:, :H]                                 # (1, H)
    b1 = vec_ref[:, H:H + P]                               # (1, P)
    w2_row = vec_ref[:, H + P:H + 2 * P]                   # (1, P)
    b2 = vec_ref[:, H + 2 * P:H + 2 * P + 1]               # (1, 1)

    # ---- shared encoder: ONE fused MXU matmul over caption + threshold tokens ----
    enc = jnp.dot(tok_ref[...], w_enc,
                  preferred_element_type=jnp.float32) + b_enc     # (2*B*S, H)
    # NOTE: sublane split 32 -> (4, 8) aligns with the (8, 128) tile grid, so this
    # reshape should not require a relayout copy at these shapes.
    enc3 = enc.reshape(2 * B, S, H)                                # (2B, S, H)
    cap_out = enc3[:B]                                             # (B, S, H)
    thr_out = enc3[B:]                                             # (B, S, H)

    # ---- lane-dense mask rebuild: single vector compare against VMEM lengths ----
    pos = jax.lax.broadcasted_iota(jnp.int32, (2 * B, S, H), 1)    # (2B, S, H)
    mask = (pos < lens_ref[...]).astype(jnp.float32)               # (2B, S, H)
    cnt = jnp.maximum(jnp.sum(mask, axis=1), 1e-9)                 # (2B, H)
    cap_m, thr_m = mask[:B], mask[B:]                              # (B, S, H)
    cap_cnt, thr_cnt = cnt[:B], cnt[B:]                            # (B, H)

    # ---- masked mean pooling of the threshold (prompt) encoder output ----
    thr_emb = jnp.sum(thr_out * thr_m, axis=1) / thr_cnt           # (B, H)

    # ---- masked per-dimension Gaussian KDE over caption tokens ----
    diff = (thr_emb[:, None, :] - cap_out) * (1.0 / BANDWIDTH)     # (B, S, H)
    kern = jnp.exp(-0.5 * diff * diff) * INV_SQRT_2PI              # (B, S, H)
    kde = jnp.sum(kern * cap_m, axis=1) / (cap_cnt * BANDWIDTH)    # (B, H)
    kde = jnp.clip(kde, -1.0e6, 1.0e6)

    # ---- pred_layer: Linear(H, P) -> ReLU -> Linear(P, 1) ----
    hdn = jnp.maximum(
        jnp.dot(kde, w1, preferred_element_type=jnp.float32) + b1, 0.0)   # (B, P)
    # Final Linear(P, 1) on the VPU: lane-dense multiply + lane reduce.
    out = jnp.sum(hdn * w2_row, axis=-1, keepdims=True) + b2              # (B, 1)
    out_ref[...] = out                                                    # single store


def tsn_forward(cap_tok, cap_lens, thr_tok, thr_lens, params):
    w_enc, b_enc, w1, b1, w2, b2 = params

    # ---- wrapper-side layout plumbing: pack everything into 4 DMAs ----
    tok = jnp.concatenate([cap_tok, thr_tok], axis=0).reshape(2 * B * S, H)
    w_slab = jnp.concatenate([w_enc, w1], axis=1)                  # (H, H+P)
    vec = jnp.zeros((1, VEC_LANES), jnp.float32)
    vec = vec.at[:, :H].set(b_enc)
    vec = vec.at[:, H:H + P].set(b1)
    vec = vec.at[:, H + P:H + 2 * P].set(w2.reshape(1, P))
    vec = vec.at[:, H + 2 * P:H + 2 * P + 1].set(b2)
    lens = jnp.concatenate([cap_lens, thr_lens]).astype(jnp.int32).reshape(2 * B, 1, 1)

    cost = pl.CostEstimate(
        flops=2 * (2 * B * S) * H * H + 2 * B * H * P + 12 * B * S * H,
        transcendentals=B * S * H,
        bytes_accessed=4 * (tok.size + w_slab.size + vec.size + lens.size + B),
    )

    grid_spec = pltpu.PrefetchScalarGridSpec(
        num_scalar_prefetch=0,
        grid=(1,),                      # whole batch resident in a single step
        in_specs=[
            pl.BlockSpec((2 * B, 1, 1), lambda i: (0, 0, 0)),      # lengths
            pl.BlockSpec((2 * B * S, H), lambda i: (0, 0)),        # token slab
            pl.BlockSpec((H, H + P), lambda i: (0, 0)),            # weight slab
            pl.BlockSpec((1, VEC_LANES), lambda i: (0, 0)),        # packed vec params
        ],
        out_specs=pl.BlockSpec((B, 1), lambda i: (0, 0)),
    )

    out = pl.pallas_call(
        tsn_kernel,
        out_shape=jax.ShapeDtypeStruct((B, 1), jnp.float32),
        grid_spec=grid_spec,
        compiler_params=pltpu.CompilerParams(dimension_semantics=("arbitrary",)),
        cost_estimate=cost,
    )(lens, tok, w_slab, vec)
    # matches `self.pred_layer(kde_values).squeeze()` -> shape (B,)
    return out.reshape(B)


def ref_forward(cap_tok, cap_mask, thr_tok, thr_mask, params):
    """Pure-JAX reference of the same forward semantics."""
    w_enc, b_enc, w1, b1, w2, b2 = params
    cap_out = cap_tok @ w_enc + b_enc
    thr_out = thr_tok @ w_enc + b_enc

    def mean_pool(x, m):
        return jnp.sum(x * m, axis=-2) / jnp.maximum(jnp.sum(m, axis=-2), 1e-9)

    thr_emb = mean_pool(thr_out, thr_mask)                         # (B, H)
    diff = (thr_emb[:, None, :] - cap_out) / BANDWIDTH             # (B, S, H)
    kern = jnp.exp(-0.5 * diff * diff) * INV_SQRT_2PI
    n = jnp.maximum(jnp.sum(cap_mask, axis=-2), 1e-9)              # (B, 1)
    kde = jnp.sum(kern * cap_mask, axis=-2) / (n * BANDWIDTH)      # (B, H)
    kde = jnp.clip(kde, -1.0e6, 1.0e6)
    hdn = jnp.maximum(kde @ w1 + b1, 0.0)
    return (hdn @ w2 + b2).reshape(B)


def make_params(key):
    ks = jax.random.split(key, 6)
    w_enc = 0.2 * jax.random.normal(ks[0], (H, H), jnp.float32)
    b_enc = 0.1 * jax.random.normal(ks[1], (1, H), jnp.float32)
    w1 = 0.2 * jax.random.normal(ks[2], (H, P), jnp.float32)
    b1 = 0.1 * jax.random.normal(ks[3], (1, P), jnp.float32)
    w2 = 0.2 * jax.random.normal(ks[4], (P, 1), jnp.float32)
    b2 = 0.1 * jax.random.normal(ks[5], (1, 1), jnp.float32)
    return (w_enc, b_enc, w1, b1, w2, b2)


if __name__ == "__main__":
    key = jax.random.PRNGKey(0)
    k_cap, k_thr, k_par = jax.random.split(key, 3)

    # Deterministic "tokenized + embedded" inputs (pre-embedding features).
    cap_tok = jax.random.normal(k_cap, (B, S, H), jnp.float32)
    thr_tok = jax.random.normal(k_thr, (B, S, H), jnp.float32)

    # Per-example valid-token lengths (replace the float attention masks).
    cap_lens = jnp.array([S, 5], dtype=jnp.int32)
    thr_lens = jnp.array([6, S], dtype=jnp.int32)

    params = make_params(k_par)

    out = tsn_forward(cap_tok, cap_lens, thr_tok, thr_lens, params)
    out = jax.block_until_ready(out)

    # Reference uses explicit float masks built from the same lengths.
    pos = jnp.arange(S)[None, :]
    cap_mask = (pos < cap_lens[:, None]).astype(jnp.float32)[..., None]  # (B, S, 1)
    thr_mask = (pos < thr_lens[:, None]).astype(jnp.float32)[..., None]  # (B, S, 1)
    ref = jax.block_until_ready(ref_forward(cap_tok, cap_mask, thr_tok, thr_mask, params))

    np.testing.assert_allclose(np.asarray(out), np.asarray(ref), rtol=1e-5, atol=1e-5)

    print("KERNEL_OK")
</pallas_src>

<mosaic_0001>
module attributes {stable_mosaic.version = 11 : i64} {
  func.func @tsn_kernel(%arg0: i32, %arg1: memref<4x1x1xi32, #tpu.memory_space<vmem>>, %arg2: memref<32x32xf32, #tpu.memory_space<vmem>>, %arg3: memref<32x48xf32, #tpu.memory_space<vmem>>, %arg4: memref<1x128xf32, #tpu.memory_space<vmem>>, %arg5: memref<2x1xf32, #tpu.memory_space<vmem>>) attributes {dimension_semantics = [#tpu.dimension_semantics<arbitrary>], iteration_bounds = array<i64: 1>, scalar_prefetch = 0 : i64, scratch_operands = 0 : i64, tpu.core_type = #tpu.core_type<tc>, window_params = [{pipeline_mode = #tpu.pipeline_mode<synchronous>, transform_indices = @transform_0, window_bounds = array<i64: 4, 1, 1>}, {pipeline_mode = #tpu.pipeline_mode<synchronous>, transform_indices = @transform_1, window_bounds = array<i64: 32, 32>}, {pipeline_mode = #tpu.pipeline_mode<synchronous>, transform_indices = @transform_2, window_bounds = array<i64: 32, 48>}, {pipeline_mode = #tpu.pipeline_mode<synchronous>, transform_indices = @transform_3, window_bounds = array<i64: 1, 128>}, {pipeline_mode = #tpu.pipeline_mode<synchronous>, transform_indices = @transform_4, window_bounds = array<i64: 2, 1>}]} {
    %c0 = arith.constant 0 : index
    %c0_0 = arith.constant 0 : index
    %0 = vector.load %arg3[%c0, %c0_0] : memref<32x48xf32, #tpu.memory_space<vmem>>, vector<32x32xf32>
    %c0_1 = arith.constant 0 : index
    %c32 = arith.constant 32 : index
    %1 = vector.load %arg3[%c0_1, %c32] : memref<32x48xf32, #tpu.memory_space<vmem>>, vector<32x16xf32>
    %c0_2 = arith.constant 0 : index
    %c0_3 = arith.constant 0 : index
    %2 = vector.load %arg4[%c0_2, %c0_3] : memref<1x128xf32, #tpu.memory_space<vmem>>, vector<1x32xf32>
    %c0_4 = arith.constant 0 : index
    %c32_5 = arith.constant 32 : index
    %3 = vector.load %arg4[%c0_4, %c32_5] : memref<1x128xf32, #tpu.memory_space<vmem>>, vector<1x16xf32>
    %c0_6 = arith.constant 0 : index
    %c48 = arith.constant 48 : index
    %4 = vector.load %arg4[%c0_6, %c48] : memref<1x128xf32, #tpu.memory_space<vmem>>, vector<1x16xf32>
    %c0_7 = arith.constant 0 : index
    %c64 = arith.constant 64 : index
    %5 = vector.load %arg4[%c0_7, %c64] : memref<1x128xf32, #tpu.memory_space<vmem>>, vector<1x1xf32>
    %c0_8 = arith.constant 0 : index
    %c0_9 = arith.constant 0 : index
    %6 = vector.load %arg2[%c0_8, %c0_9] : memref<32x32xf32, #tpu.memory_space<vmem>>, vector<32x32xf32>
    %cst = arith.constant dense<0.000000e+00> : vector<32x32xf32>
    %7 = tpu.matmul %6, %0, %cst {dimension_numbers = #tpu.dot_dimension_numbers<[1], [0], [0], [1], [0, 0, 1, 1], [], []>} : vector<32x32xf32>, vector<32x32xf32>, vector<32x32xf32> -> vector<32x32xf32>
    %8 = vector.broadcast %2 : vector<1x32xf32> to vector<32x32xf32>
    %9 = arith.addf %7, %8 : vector<32x32xf32>
    %10 = vector.shape_cast %9 : vector<32x32xf32> to vector<4x8x32xf32>
    %11 = vector.extract_strided_slice %10 {offsets = [0, 0, 0], sizes = [2, 8, 32], strides = [1, 1, 1]} : vector<4x8x32xf32> to vector<2x8x32xf32>
    %12 = vector.extract_strided_slice %10 {offsets = [2, 0, 0], sizes = [2, 8, 32], strides = [1, 1, 1]} : vector<4x8x32xf32> to vector<2x8x32xf32>
    %13 = tpu.iota {dimensions = array<i32: 1>} : vector<4x8x32xi32>
    %c0_10 = arith.constant 0 : index
    %c0_11 = arith.constant 0 : index
    %c0_12 = arith.constant 0 : index
    %14 = vector.load %arg1[%c0_10, %c0_11, %c0_12] : memref<4x1x1xi32, #tpu.memory_space<vmem>>, vector<4x1x1xi32>
    %15 = vector.broadcast %14 : vector<4x1x1xi32> to vector<4x8x32xi32>
    %16 = arith.cmpi slt, %13, %15 : vector<4x8x32xi32>
    %17 = arith.extui %16 : vector<4x8x32xi1> to vector<4x8x32xi32>
    %18 = arith.sitofp %17 : vector<4x8x32xi32> to vector<4x8x32xf32>
    %cst_13 = arith.constant dense<0.000000e+00> : vector<4x32xf32>
    %19 = vector.multi_reduction <add>, %18, %cst_13 [1] : vector<4x8x32xf32> to vector<4x32xf32>
    %cst_14 = arith.constant 9.99999971E-10 : f32
    %20 = vector.broadcast %cst_14 : f32 to vector<4x32xf32>
    %21 = arith.maximumf %19, %20 : vector<4x32xf32>
    %22 = vector.extract_strided_slice %18 {offsets = [0, 0, 0], sizes = [2, 8, 32], strides = [1, 1, 1]} : vector<4x8x32xf32> to vector<2x8x32xf32>
    %23 = vector.extract_strided_slice %18 {offsets = [2, 0, 0], sizes = [2, 8, 32], strides = [1, 1, 1]} : vector<4x8x32xf32> to vector<2x8x32xf32>
    %24 = vector.extract_strided_slice %21 {offsets = [0, 0], sizes = [2, 32], strides = [1, 1]} : vector<4x32xf32> to vector<2x32xf32>
    %25 = vector.extract_strided_slice %21 {offsets = [2, 0], sizes = [2, 32], strides = [1, 1]} : vector<4x32xf32> to vector<2x32xf32>
    %26 = arith.mulf %12, %23 : vector<2x8x32xf32>
    %cst_15 = arith.constant dense<0.000000e+00> : vector<2x32xf32>
    %27 = vector.multi_reduction <add>, %26, %cst_15 [1] : vector<2x8x32xf32> to vector<2x32xf32>
    %28 = arith.divf %27, %25 : vector<2x32xf32>
    %29 = vector.shape_cast %28 : vector<2x32xf32> to vector<2x1x32xf32>
    %30 = vector.broadcast %29 : vector<2x1x32xf32> to vector<2x8x32xf32>
    %31 = arith.subf %30, %11 : vector<2x8x32xf32>
    %cst_16 = arith.constant 2.000000e+00 : f32
    %32 = vector.broadcast %cst_16 : f32 to vector<2x8x32xf32>
    %33 = arith.mulf %31, %32 : vector<2x8x32xf32>
    %cst_17 = arith.constant -5.000000e-01 : f32
    %34 = vector.broadcast %cst_17 : f32 to vector<2x8x32xf32>
    %35 = arith.mulf %34, %33 : vector<2x8x32xf32>
    %36 = arith.mulf %35, %33 : vector<2x8x32xf32>
    %37 = math.exp %36 : vector<2x8x32xf32>
    %cst_18 = arith.constant 0.398942292 : f32
    %38 = vector.broadcast %cst_18 : f32 to vector<2x8x32xf32>
    %39 = arith.mulf %37, %38 : vector<2x8x32xf32>
    %40 = arith.mulf %39, %22 : vector<2x8x32xf32>
    %cst_19 = arith.constant dense<0.000000e+00> : vector<2x32xf32>
    %41 = vector.multi_reduction <add>, %40, %cst_19 [1] : vector<2x8x32xf32> to vector<2x32xf32>
    %cst_20 = arith.constant 5.000000e-01 : f32
    %42 = vector.broadcast %cst_20 : f32 to vector<2x32xf32>
    %43 = arith.mulf %24, %42 : vector<2x32xf32>
    %44 = arith.divf %41, %43 : vector<2x32xf32>
    %cst_21 = arith.constant -1.000000e+06 : f32
    %cst_22 = arith.constant 1.000000e+06 : f32
    %45 = vector.broadcast %cst_21 : f32 to vector<2x32xf32>
    %46 = arith.maximumf %45, %44 : vector<2x32xf32>
    %47 = vector.broadcast %cst_22 : f32 to vector<2x32xf32>
    %48 = arith.minimumf %47, %46 : vector<2x32xf32>
    %cst_23 = arith.constant dense<0.000000e+00> : vector<2x16xf32>
    %49 = tpu.matmul %48, %1, %cst_23 {dimension_numbers = #tpu.dot_dimension_numbers<[1], [0], [0], [1], [0, 0, 1, 1], [], []>} : vector<2x32xf32>, vector<32x16xf32>, vector<2x16xf32> -> vector<2x16xf32>
    %50 = vector.broadcast %3 : vector<1x16xf32> to vector<2x16xf32>
    %51 = arith.addf %49, %50 : vector<2x16xf32>
    %cst_24 = arith.constant 0.000000e+00 : f32
    %52 = vector.broadcast %cst_24 : f32 to vector<2x16xf32>
    %53 = arith.maximumf %51, %52 : vector<2x16xf32>
    %54 = vector.broadcast %4 : vector<1x16xf32> to vector<2x16xf32>
    %55 = arith.mulf %53, %54 : vector<2x16xf32>
    %cst_25 = arith.constant dense<0.000000e+00> : vector<2xf32>
    %56 = vector.multi_reduction <add>, %55, %cst_25 [1] : vector<2x16xf32> to vector<2xf32>
    %57 = vector.shape_cast %56 : vector<2xf32> to vector<2x1xf32>
    %58 = vector.broadcast %5 : vector<1x1xf32> to vector<2x1xf32>
    %59 = arith.addf %57, %58 : vector<2x1xf32>
    %c0_26 = arith.constant 0 : index
    %c0_27 = arith.constant 0 : index
    %60 = vector.load %arg5[%c0_26, %c0_27] : memref<2x1xf32, #tpu.memory_space<vmem>>, vector<2x1xf32>
    tpu.vector_store %arg5[%c0_26, %c0_27], %59 {strides = array<i32>} : memref<2x1xf32, #tpu.memory_space<vmem>>, vector<2x1xf32>,
    return
  }
  func.func @transform_0(%arg0: i32) -> (i32, i32, i32) {
    %c0_i32 = arith.constant 0 : i32
    %c0_i32_0 = arith.constant 0 : i32
    %c0_i32_1 = arith.constant 0 : i32
    %c0_i32_2 = arith.constant 0 : i32
    return %c0_i32, %c0_i32_0, %c0_i32_1 : i32, i32, i32
  }
  func.func @transform_1(%arg0: i32) -> (i32, i32) {
    %c0_i32 = arith.constant 0 : i32
    %c0_i32_0 = arith.constant 0 : i32
    %c0_i32_1 = arith.constant 0 : i32
    return %c0_i32, %c0_i32_0 : i32, i32
  }
  func.func @transform_2(%arg0: i32) -> (i32, i32) {
    %c0_i32 = arith.constant 0 : i32
    %c0_i32_0 = arith.constant 0 : i32
    %c0_i32_1 = arith.constant 0 : i32
    return %c0_i32, %c0_i32_0 : i32, i32
  }
  func.func @transform_3(%arg0: i32) -> (i32, i32) {
    %c0_i32 = arith.constant 0 : i32
    %c0_i32_0 = arith.constant 0 : i32
    %c0_i32_1 = arith.constant 0 : i32
    return %c0_i32, %c0_i32_0 : i32, i32
  }
  func.func @transform_4(%arg0: i32) -> (i32, i32) {
    %c0_i32 = arith.constant 0 : i32
    %c0_i32_0 = arith.constant 0 : i32
    %c0_i32_1 = arith.constant 0 : i32
    return %c0_i32, %c0_i32_0 : i32, i32
  }
}

</mosaic_0001>

<llo_original>
// kernel: tpu_custom_call.1
$region0: #{tpu_custom_call.1}
  #allocation0 [shape = 'u32[]', space=smem, size = 0x4, offset = 0x4, fixed_abs, tag = 'smem constant byte address 0x4 - core index']
  #allocation1 [shape = 'u32[72,128]{1,0:T(1,128)}', space=vmem, size = 0x9000, scoped, tag = 'internal scratch']
  %s0 = inlined_call_operand.vmem [shape: s32[4,1,1], index: 0, kind: input, shape index: {}]
  %s1 = inlined_call_operand.hbm [shape: f32[32,32], index: 1, kind: input, shape index: {}]
  %s2 = inlined_call_operand.hbm [shape: f32[32,48], index: 2, kind: input, shape index: {}]
  %s3 = inlined_call_operand.vmem [shape: f32[1,128], index: 3, kind: input, shape index: {}]
  %s4 = inlined_call_operand.vmem [shape: f32[2,1], index: 4, kind: output, shape index: {}]
  %s5 = sld [smem:[#allocation0]]
  $region34: #{tpu_custom_call.1} parent=0
    _
  %s7 = ssub.s32 1, %s5
  %s8 = scalar_select 0, %s7, %s5
  $region1: #{tpu_custom_call.1} parent=0
    #allocation2 [shape = 'u8[16384]{0}', space=vmem, size = 0x4000, scoped, tag = 'input window, operand 1, single buffered']
    #allocation3 [shape = 's32[1]{0}', space=sflag, size = 0x4, scoped, tag = 'scoped memory for tpu_custom_call.1']
    #allocation4 [shape = 'u8[16384]{0}', space=vmem, size = 0x4000, scoped, tag = 'input window, operand 2, single buffered']
    #allocation5 [shape = 's32[1]{0}', space=sflag, size = 0x4, scoped, tag = 'scoped memory for tpu_custom_call.1']
    %9 = vsyncpa [#allocation3], 0
    %10 = vsyncpa [#allocation5], 0
    // Predicated region
    $region2: #{tpu_custom_call.1} parent=1 // pred_check
      _
    $region3: #{tpu_custom_call.1} parent=1 // pred_check_branch
      %12 = sbr.rel (0) target = $region5
    $region4: #{tpu_custom_call.1} parent=1 // pred_region
      _
    $region5: #{tpu_custom_call.1} parent=1 // pred_fallthru
      _
    // Predicated region
    $region6: #{tpu_custom_call.1} parent=1 // pred_check
      _
    $region7: #{tpu_custom_call.1} parent=1 // pred_check_branch
      %14 = sbr.rel (0) target = $region9
    $region8: #{tpu_custom_call.1} parent=1 // pred_region
      %16 = vsyncadd [#allocation3], 0
      %s17 = sshll.u32 %s1, 4
      %s18 = int_to_ptr.hbm [resolvable:$true] %s17
      %s19 = sshll.u32 [#allocation2], 4
      %s20 = int_to_ptr.vmem [resolvable:$true] %s19
      %25 = dma.hbm_to_vmem [thread:$0]  %s18, 512, %s20, [#allocation3], 128, 128, 8
    $region9: #{tpu_custom_call.1} parent=1 // pred_fallthru
      _
    // Predicated region
    $region10: #{tpu_custom_call.1} parent=1 // pred_check
      _
    $region11: #{tpu_custom_call.1} parent=1 // pred_check_branch
      %27 = sbr.rel (0) target = $region13
    $region12: #{tpu_custom_call.1} parent=1 // pred_region
      %29 = vsyncadd [#allocation5], 0
      %s30 = sshll.u32 %s2, 4
      %s31 = int_to_ptr.hbm [resolvable:$true] %s30
      %s32 = sshll.u32 [#allocation4], 4
      %s33 = int_to_ptr.vmem [resolvable:$true] %s32
      %38 = dma.hbm_to_vmem [thread:$0]  %s31, 512, %s33, [#allocation5], 128, 128, 8
    $region13: #{tpu_custom_call.1} parent=1 // pred_fallthru
      _
    // Predicated region
    $region14: #{tpu_custom_call.1} parent=1 // pred_check
      _
    $region15: #{tpu_custom_call.1} parent=1 // pred_check_branch
      %40 = sbr.rel (0) target = $region17
    $region16: #{tpu_custom_call.1} parent=1 // pred_region
      _
    $region17: #{tpu_custom_call.1} parent=1 // pred_fallthru
      _
    // Predicated region
    $region18: #{tpu_custom_call.1} parent=1 // pred_check
      _
    $region19: #{tpu_custom_call.1} parent=1 // pred_check_branch
      %42 = sbr.rel (0) target = $region21
    $region20: #{tpu_custom_call.1} parent=1 // pred_region
      %44 = dma.done [#allocation3], 512
    $region21: #{tpu_custom_call.1} parent=1 // pred_fallthru
      _
    // Predicated region
    $region22: #{tpu_custom_call.1} parent=1 // pred_check
      _
    $region23: #{tpu_custom_call.1} parent=1 // pred_check_branch
      %46 = sbr.rel (0) target = $region25
    $region24: #{tpu_custom_call.1} parent=1 // pred_region
      %48 = dma.done [#allocation5], 512
    $region25: #{tpu_custom_call.1} parent=1 // pred_fallthru
      _
    %v49 = vld [vmem:[#allocation4] sm:$0xff]
    %v50 = vld [vmem:[#allocation4 + $0x8] sm:$0xff]
    %v51 = vld [vmem:[#allocation4 + $0x10] sm:$0xff]
    %v52 = vld [vmem:[#allocation4 + $0x18] sm:$0xff]
    %v53 = vld [vmem:[%s3] sm:$0x1]
    %v54 = vld [vmem:[#allocation2] sm:$0xff]
    %v55 = vld [vmem:[#allocation2 + $0x8] sm:$0xff]
    %v56 = vld [vmem:[#allocation2 + $0x10] sm:$0xff]
    %v57 = vld [vmem:[#allocation2 + $0x18] sm:$0xff]
    %v59 = vperm.slane %v53, 0
    %vm61 = vcmask 261120
    %v63 = vsel %vm61, %v54, 0
    %v66 = vsel %vm61, %v55, 0
    %v69 = vsel %vm61, %v56, 0
    %v72 = vsel %vm61, %v57, 0
    %74 = vmatpush.msra.mxu0 0.0
    %75 = vmatpush.msra.mxu0 0.0
    %76 = vmatpush.msra.mxu0 0.0
    %77 = vmatpush.msra.mxu0 0.0
    %78 = vmatpush.msra.mxu0 0.0
    %79 = vmatpush.msra.mxu0 0.0
    %80 = vmatpush.msra.mxu0 0.0
    %81 = vmatpush.msra.mxu0 0.0
    %82 = vmatpush.msra.mxu0 0.0
    %83 = vmatpush.msra.mxu0 0.0
    %84 = vmatpush.msra.mxu0 0.0
    %85 = vmatpush.msra.mxu0 0.0
    %86 = vmatpush.msra.mxu0 %v52
    %87 = vmatpush.msra.mxu0 %v51
    %88 = vmatpush.msra.mxu0 %v50
    %89 = vmatpush.msra.mxu0 %v49
    %90 = vmatmul.f32.gmra.mxu0 %v63
    %v91 = vpop.f32.mrf.mxu0
    %v92 = vadd.f32 %v59, %v91
    %93 = vmatmul.f32.gmra.mxu0 %v66
    %v94 = vpop.f32.mrf.mxu0
    %v95 = vadd.f32 %v59, %v94
    %96 = vmatmul.f32.gmra.mxu0 %v69
    %v97 = vpop.f32.mrf.mxu0
    %v98 = vadd.f32 %v59, %v97
    %99 = vmatmul.f32.gmra.mxu0 %v72
    %v100 = vpop.f32.mrf.mxu0
    %v101 = vadd.f32 %v59, %v100
    %102 = vdwg.mxu0
    %v103 = vlaneseq
    %v104 = vshrl.u32 %v103, 7
    %v105 = vld [vmem:[%s0] sm:$0x1]
    %v106 = vld [vmem:[%s0 + $0x1] sm:$0x1]
    %v107 = vld [vmem:[%s0 + $0x2] sm:$0x1]
    %v108 = vld [vmem:[%s0 + $0x3] sm:$0x1]
    %v109 = vperm.slane %v105, 0
    %v110 = vperm.slane %v106, 0
    %v111 = vperm.slane %v107, 0
    %v112 = vperm.slane %v108, 0
    %113 = vset.pattern.permute.xlu0 0
    %114 = vperm.xlu0 %113, %v109
    %v115 = vpop.permute.xlu0 %114
    %116 = vset.pattern.permute.xlu0 0
    %117 = vperm.xlu0 %116, %v110
    %v118 = vpop.permute.xlu0 %117
    %119 = vset.pattern.permute.xlu0 0
    %120 = vperm.xlu0 %119, %v111
    %v121 = vpop.permute.xlu0 %120
    %122 = vset.pattern.permute.xlu0 0
    %123 = vperm.xlu0 %122, %v112
    %v124 = vpop.permute.xlu0 %123
    %vm125 = vcmp.lt.s32.totalorder %v104, %v115
    %vm126 = vcmp.lt.s32.totalorder %v104, %v118
    %vm127 = vcmp.lt.s32.totalorder %v104, %v121
    %vm128 = vcmp.lt.s32.totalorder %v104, %v124
    %v129 = vsel %vm125, 1, 0
    %v130 = vsel %vm126, 1, 0
    %v131 = vsel %vm127, 1, 0
    %v132 = vsel %vm128, 1, 0
    %v133 = vcvt.s32.f32 %v129
    %v134 = vcvt.s32.f32 %v130
    %v135 = vcvt.s32.f32 %v131
    %v136 = vcvt.s32.f32 %v132
    %v137 = vrot.slane %v133, 4
    %v138 = vadd.f32 %v133, %v137
    %v139 = vrot.slane %v138, 2
    %v140 = vadd.f32 %v138, %v139
    %v141 = vrot.slane %v140, 1
    %v142 = vadd.f32 %v140, %v141
    %v143 = vrot.slane %v134, 4
    %v144 = vadd.f32 %v134, %v143
    %v145 = vrot.slane %v144, 2
    %v146 = vadd.f32 %v144, %v145
    %v147 = vrot.slane %v146, 1
    %v148 = vadd.f32 %v146, %v147
    %v149 = vrot.slane %v135, 4
    %v150 = vadd.f32 %v135, %v149
    %v151 = vrot.slane %v150, 2
    %v152 = vadd.f32 %v150, %v151
    %v153 = vrot.slane %v152, 1
    %v154 = vadd.f32 %v152, %v153
    %v155 = vrot.slane %v136, 4
    %v156 = vadd.f32 %v136, %v155
    %v157 = vrot.slane %v156, 2
    %v158 = vadd.f32 %v156, %v157
    %v159 = vrot.slane %v158, 1
    %v160 = vadd.f32 %v158, %v159
    %v161 = vmax.f32 %v142, 1e-09
    %v162 = vmax.f32 %v148, 1e-09
    %v163 = vmax.f32 %v154, 1e-09
    %v164 = vmax.f32 %v160, 1e-09
    %v165 = vmul.f32 %v98, %v135
    %v166 = vmul.f32 %v101, %v136
    %v167 = vsel %vm61, %v165, 0.0
    %v168 = vrot.slane %v167, 4
    %v169 = vadd.f32 %v167, %v168
    %v170 = vrot.slane %v169, 2
    %v171 = vadd.f32 %v169, %v170
    %v172 = vrot.slane %v171, 1
    %v173 = vadd.f32 %v171, %v172
    %v174 = vsel %vm61, %v166, 0.0
    %v175 = vrot.slane %v174, 4
    %v176 = vadd.f32 %v174, %v175
    %v177 = vrot.slane %v176, 2
    %v178 = vadd.f32 %v176, %v177
    %v179 = vrot.slane %v178, 1
    %v180 = vadd.f32 %v178, %v179
    %v181 = vrcp.pop %v163
    %v182 = vmul.f32 %v163, %v181
    %v183 = vsub.f32 1.0, %v182
    %v184 = vmul.f32 %v181, %v183
    %v185 = vadd.f32 %v181, %v184
    %vm186 = vweird.f32 %v163
    %vm187 = vweird.f32 %v181
    %vm188 = vmor %vm186, %vm187
    %v189 = vsel %vm188, %v181, %v185
    %v190 = vand.u32 2147483647, %v163
    %vm191 = vcmp.eq.f32.partialorder %v190, 8.507059e+37
    %v192 = vand.u32 %v163, 2147483648
    %v193 = vor.u32 1.1754944e-38, %v192
    %v194 = vsel %vm191, %v193, %v189
    %v195 = vmul.f32 %v173, %v194
    %v196 = vrcp.pop %v164
    %v197 = vmul.f32 %v164, %v196
    %v198 = vsub.f32 1.0, %v197
    %v199 = vmul.f32 %v196, %v198
    %v200 = vadd.f32 %v196, %v199
    %vm201 = vweird.f32 %v164
    %vm202 = vweird.f32 %v196
    %vm203 = vmor %vm201, %vm202
    %v204 = vsel %vm203, %v196, %v200
    %v205 = vand.u32 2147483647, %v164
    %vm206 = vcmp.eq.f32.partialorder %v205, 8.507059e+37
    %v207 = vand.u32 %v164, 2147483648
    %v208 = vor.u32 1.1754944e-38, %v207
    %v209 = vsel %vm206, %v208, %v204
    %v210 = vmul.f32 %v180, %v209
    %v211 = vsub.f32 %v195, %v92
    %v212 = vsub.f32 %v210, %v95
    %v213 = vmul.f32 %v211, 2.0
    %v214 = vmul.f32 %v212, 2.0
    %v215 = vmul.f32 %v213, -0.5
    %v216 = vmul.f32 %v214, -0.5
    %v217 = vmul.f32 %v215, %v213
    %v218 = vmul.f32 %v216, %v214
    %v219 = vmul.f32 %v217, 1.442695
    %v220 = vpow.pop %v219
    %v221 = vmul.f32 %v218, 1.442695
    %v222 = vpow.pop %v221
    %v223 = vmul.f32 %v220, 0.3989423
    %v224 = vmul.f32 %v222, 0.3989423
    %v225 = vmul.f32 %v223, %v133
    %v226 = vmul.f32 %v224, %v134
    %v227 = vsel %vm61, %v225, 0.0
    %v228 = vrot.slane %v227, 4
    %v229 = vadd.f32 %v227, %v228
    %v230 = vrot.slane %v229, 2
    %v231 = vadd.f32 %v229, %v230
    %v232 = vrot.slane %v231, 1
    %v233 = vadd.f32 %v231, %v232
    %v234 = vsel %vm61, %v226, 0.0
    %v235 = vrot.slane %v234, 4
    %v236 = vadd.f32 %v234, %v235
    %v237 = vrot.slane %v236, 2
    %v238 = vadd.f32 %v236, %v237
    %v239 = vrot.slane %v238, 1
    %v240 = vadd.f32 %v238, %v239
    %v241 = vmul.f32 %v161, 0.5
    %v242 = vmul.f32 %v162, 0.5
    %v243 = vrcp.pop %v241
    %v244 = vmul.f32 %v241, %v243
    %v245 = vsub.f32 1.0, %v244
    %v246 = vmul.f32 %v243, %v245
    %v247 = vadd.f32 %v243, %v246
    %vm248 = vweird.f32 %v241
    %vm249 = vweird.f32 %v243
    %vm250 = vmor %vm248, %vm249
    %v251 = vsel %vm250, %v243, %v247
    %v252 = vand.u32 2147483647, %v241
    %vm253 = vcmp.eq.f32.partialorder %v252, 8.507059e+37
    %v254 = vand.u32 %v241, 2147483648
    %v255 = vor.u32 1.1754944e-38, %v254
    %v256 = vsel %vm253, %v255, %v251
    %v257 = vmul.f32 %v233, %v256
    %v258 = vrcp.pop %v242
    %v259 = vmul.f32 %v242, %v258
    %v260 = vsub.f32 1.0, %v259
    %v261 = vmul.f32 %v258, %v260
    %v262 = vadd.f32 %v258, %v261
    %vm263 = vweird.f32 %v242
    %vm264 = vweird.f32 %v258
    %vm265 = vmor %vm263, %vm264
    %v266 = vsel %vm265, %v258, %v262
    %v267 = vand.u32 2147483647, %v242
    %vm268 = vcmp.eq.f32.partialorder %v267, 8.507059e+37
    %v269 = vand.u32 %v242, 2147483648
    %v270 = vor.u32 1.1754944e-38, %v269
    %v271 = vsel %vm268, %v270, %v266
    %v272 = vmul.f32 %v240, %v271
    %v273 = vmax.f32 %v257, -1000000.0
    %v274 = vmax.f32 %v272, -1000000.0
    %v275 = vmin.f32 %v273, 1000000.0
    %v276 = vmin.f32 %v274, 1000000.0
    %vm279 = vcmask 1041409
    %v280 = vsel %vm279, %v276, %v275
    %285 = vrot.lane.b32.xlu0 %v49, 96
    %v286 = vpop.permute.xlu0 %285
    %287 = vrot.lane.b32.xlu0 %v50, 96
    %v288 = vpop.permute.xlu0 %287
    %289 = vrot.lane.b32.xlu0 %v51, 96
    %v290 = vpop.permute.xlu0 %289
    %291 = vrot.lane.b32.xlu0 %v52, 96
    %v292 = vpop.permute.xlu0 %291
    %297 = vrot.lane.b32.xlu0 %v59, 96
    %v298 = vpop.permute.xlu0 %297
    %v300 = vsel %vm61, %v280, 0
    %302 = vmatpush.msra.mxu0 0.0
    %303 = vmatpush.msra.mxu0 0.0
    %304 = vmatpush.msra.mxu0 0.0
    %305 = vmatpush.msra.mxu0 0.0
    %306 = vmatpush.msra.mxu0 0.0
    %307 = vmatpush.msra.mxu0 0.0
    %308 = vmatpush.msra.mxu0 0.0
    %309 = vmatpush.msra.mxu0 0.0
    %310 = vmatpush.msra.mxu0 0.0
    %311 = vmatpush.msra.mxu0 0.0
    %312 = vmatpush.msra.mxu0 0.0
    %313 = vmatpush.msra.mxu0 0.0
    %314 = vmatpush.msra.mxu0 %v292
    %315 = vmatpush.msra.mxu0 %v290
    %316 = vmatpush.msra.mxu0 %v288
    %317 = vmatpush.msra.mxu0 %v286
    %318 = vmatmul.f32.gmra.mxu0 %v300
    %v319 = vpop.f32.mrf.mxu0
    %v320 = vadd.f32 %v298, %v319
    %321 = vdwg.mxu0
    %v322 = vmax.f32 %v320, 0.0
    %323 = vrot.lane.b32.xlu0 %v59, 80
    %v324 = vpop.permute.xlu0 %323
    %v326 = vmul.f32 %v322, %v324
    %vm327 = vcmask 123904
    %v328 = vsel %vm327, %v326, 0.0
    %329 = vadd.xlane.f32.xlu0 %v328
    %v330 = vpop.xlane.xlu0 %329
    %v331 = vadd.f32 %v330, %v59
    %333 = vrot.lane.b32.xlu0 %v331, 64
    %v334 = vpop.permute.xlu0 %333
    %vm336 = vcmask 1024
    %337 = vst.msk [vmem:[%s4] sm:$0x3] %vm336, %v334
    // Predicated region
    $region26: #{tpu_custom_call.1} parent=1 // pred_check
      _
    $region27: #{tpu_custom_call.1} parent=1 // pred_check_branch
      %339 = sbr.rel (0) target = $region29
    $region28: #{tpu_custom_call.1} parent=1 // pred_region
      _
    $region29: #{tpu_custom_call.1} parent=1 // pred_fallthru
      _
    // Predicated region
    $region30: #{tpu_custom_call.1} parent=1 // pred_check
      _
    $region31: #{tpu_custom_call.1} parent=1 // pred_check_branch
      %341 = sbr.rel (0) target = $region33
    $region32: #{tpu_custom_call.1} parent=1 // pred_region
      _
    $region33: #{tpu_custom_call.1} parent=1 // pred_fallthru
      _
    %342 = vsyncpa [#allocation3], 1
    %343 = vsyncpa [#allocation5], 1

</llo_original>
